<compile_context>
chip_gen: v5e
topology: v5e:2x2
jax: 0.10.0
libtpu: 0.0.40
codegen_flags: <defaults>
</compile_context>

<pallas_src>
import math

import jax
import jax.numpy as jnp
from jax.experimental import pallas as pl
from jax.experimental.pallas import tpu as pltpu


def _pos_enc_kernel(table_ref, o_ref):
    # table_ref: (2, emb) resident table — row 0 = den (inv freq), row 1 = phase
    # o_ref:     (tile_s, emb) output tile (leading dim of size 1 is squeezed)
    ts, _ = o_ref.shape
    tile_idx = pl.program_id(0)

    # Position column: (tile_s, 1) sublane iota, offset by this tile's start.
    pos = (jax.lax.broadcasted_iota(jnp.int32, (ts, 1), 0)
           + tile_idx * ts).astype(jnp.float32)

    den = table_ref[0:1, :]    # (1, emb)
    phase = table_ref[1:2, :]  # (1, emb): 0 for even cols, pi/2 for odd cols

    # sin(p*den)        for even columns
    # sin(p*den + pi/2) = cos(p*den) for odd columns
    o_ref[...] = jnp.sin(pos * den + phase)


def _choose_tile(seqlen: int, emb_size: int) -> int:
    """Multiple-of-8 sequence tile targeting ~1 MiB f32 blocks."""
    if seqlen % 8 == 0:
        rows_for_1mib = max(8, (((1 << 20) // (emb_size * 4)) // 8) * 8)
        return min(seqlen, rows_for_1mib, 1024)
    if seqlen <= 1024:
        return seqlen  # full-extent block (allowed even if not /8)
    return 512         # ragged last tile; block shape stays /8-aligned


def positional_encoding_forward(token_ids: jax.Array, emb_size: int,
                                maxlen: int = 5000) -> jax.Array:
    """Pallas equivalent of PositionalEncoding.forward.

    token_ids: (bs, seqlen) int array (values unused; only shape matters).
    Returns: (1, seqlen, emb_size) float32.
    """
    seqlen = token_ids.shape[1]
    assert seqlen <= maxlen
    assert emb_size % 2 == 0, "emb_size must be even (sin/cos interleave)"

    # Tiny resident table: row 0 = den per column, row 1 = phase per column.
    col = jnp.arange(emb_size, dtype=jnp.int32)
    pair = (col // 2).astype(jnp.float32)
    den_row = jnp.exp(pair * (-2.0 * math.log(10000.0) / emb_size))
    phase_row = jnp.where((col % 2) == 0, 0.0, math.pi / 2.0).astype(jnp.float32)
    table = jnp.stack([den_row, phase_row], axis=0)  # (2, emb_size) f32

    tile_s = _choose_tile(seqlen, emb_size)
    grid = (pl.cdiv(seqlen, tile_s),)

    cost = pl.CostEstimate(
        flops=2 * seqlen * emb_size,            # one mul + one add per element
        transcendentals=seqlen * emb_size,      # one sin per element
        bytes_accessed=seqlen * emb_size * 4 + 2 * emb_size * 4,
    )

    out = pl.pallas_call(
        _pos_enc_kernel,
        out_shape=jax.ShapeDtypeStruct((1, seqlen, emb_size), jnp.float32),
        grid_spec=pltpu.PrefetchScalarGridSpec(
            num_scalar_prefetch=0,
            grid=grid,
            in_specs=[
                # Table stays resident in VMEM (constant block index).
                pl.BlockSpec((2, emb_size), lambda i: (0, 0)),
            ],
            # Leading size-1 dim squeezed; emb kept whole on the lane axis.
            out_specs=pl.BlockSpec((None, tile_s, emb_size),
                                   lambda i: (0, i, 0)),
        ),
        compiler_params=pltpu.CompilerParams(
            dimension_semantics=("parallel",),
        ),
        cost_estimate=cost,
    )(table)
    return out


def _reference(seqlen: int, emb_size: int) -> jnp.ndarray:
    # Pure-JAX reference mirroring the PyTorch buffer construction.
    den = jnp.exp(-jnp.arange(0, emb_size, 2, dtype=jnp.float32)
                  * math.log(10000.0) / emb_size)
    pos = jnp.arange(0, seqlen, dtype=jnp.float32).reshape(seqlen, 1)
    pe = jnp.zeros((seqlen, emb_size), jnp.float32)
    pe = pe.at[:, 0::2].set(jnp.sin(pos * den))
    pe = pe.at[:, 1::2].set(jnp.cos(pos * den))
    return pe[None, :, :]  # (1, seqlen, emb_size)


if __name__ == "__main__":
    key = jax.random.PRNGKey(0)
    bs, seqlen, emb_size = 2, 8, 32

    # token_ids: (bs, seqlen) int32 — only its shape is consumed by forward.
    token_ids = jax.random.randint(key, (bs, seqlen), 0, 1000, dtype=jnp.int32)

    out = positional_encoding_forward(token_ids, emb_size=emb_size, maxlen=5000)
    out = jax.block_until_ready(out)

    ref = _reference(seqlen, emb_size)
    assert out.shape == (1, seqlen, emb_size), out.shape
    assert jnp.allclose(out, ref, atol=1e-5, rtol=1e-5), "mismatch vs reference"

    # TODO(synk): nn.Dropout is defined in the module but never applied in
    # forward, so it is intentionally not implemented here.
    print("KERNEL_OK")
</pallas_src>

<mosaic_0001>
module attributes {stable_mosaic.version = 11 : i64} {
  func.func @_pos_enc_kernel(%arg0: i32, %arg1: memref<2x32xf32, #tpu.memory_space<vmem>>, %arg2: memref<1x8x32xf32, #tpu.memory_space<vmem>>) attributes {dimension_semantics = [#tpu.dimension_semantics<parallel>], iteration_bounds = array<i64: 1>, scalar_prefetch = 0 : i64, scratch_operands = 0 : i64, tpu.core_type = #tpu.core_type<tc>, window_params = [{pipeline_mode = #tpu.pipeline_mode<synchronous>, transform_indices = @transform_0, window_bounds = array<i64: 2, 32>}, {transform_indices = @transform_1, window_bounds = array<i64: 1, 8, 32>}]} {
    %0 = tpu.iota {dimensions = array<i32: 0>} : vector<8x1xi32>
    %c8_i32 = arith.constant 8 : i32
    %1 = arith.muli %arg0, %c8_i32 : i32
    %2 = vector.broadcast %1 : i32 to vector<8x1xi32>
    %3 = arith.addi %0, %2 : vector<8x1xi32>
    %4 = arith.sitofp %3 : vector<8x1xi32> to vector<8x1xf32>
    %c0 = arith.constant 0 : index
    %c0_0 = arith.constant 0 : index
    %5 = vector.load %arg1[%c0, %c0_0] : memref<2x32xf32, #tpu.memory_space<vmem>>, vector<1x32xf32>
    %c1 = arith.constant 1 : index
    %c0_1 = arith.constant 0 : index
    %6 = vector.load %arg1[%c1, %c0_1] : memref<2x32xf32, #tpu.memory_space<vmem>>, vector<1x32xf32>
    %7 = vector.broadcast %4 : vector<8x1xf32> to vector<8x32xf32>
    %8 = vector.broadcast %5 : vector<1x32xf32> to vector<8x32xf32>
    %9 = arith.mulf %7, %8 : vector<8x32xf32>
    %10 = vector.broadcast %6 : vector<1x32xf32> to vector<8x32xf32>
    %11 = arith.addf %9, %10 : vector<8x32xf32>
    %12 = math.sin %11 : vector<8x32xf32>
    %c0_2 = arith.constant 0 : index
    %c0_3 = arith.constant 0 : index
    %c0_4 = arith.constant 0 : index
    %13 = vector.load %arg2[%c0_2, %c0_3, %c0_4] : memref<1x8x32xf32, #tpu.memory_space<vmem>>, vector<1x8x32xf32>
    %14 = vector.shape_cast %13 : vector<1x8x32xf32> to vector<8x32xf32>
    %15 = vector.shape_cast %12 : vector<8x32xf32> to vector<1x8x32xf32>
    tpu.vector_store %arg2[%c0_2, %c0_3, %c0_4], %15 {strides = array<i32>} : memref<1x8x32xf32, #tpu.memory_space<vmem>>, vector<1x8x32xf32>,
    return
  }
  func.func @transform_0(%arg0: i32) -> (i32, i32) {
    %c0_i32 = arith.constant 0 : i32
    %c0_i32_0 = arith.constant 0 : i32
    %c0_i32_1 = arith.constant 0 : i32
    return %c0_i32, %c0_i32_0 : i32, i32
  }
  func.func @transform_1(%arg0: i32) -> (i32, i32, i32) {
    %c0_i32 = arith.constant 0 : i32
    %c0_i32_0 = arith.constant 0 : i32
    %c0_i32_1 = arith.constant 0 : i32
    return %c0_i32, %arg0, %c0_i32_0 : i32, i32, i32
  }
}

</mosaic_0001>

<llo_original>
// kernel: tpu_custom_call.1
$region0: #{tpu_custom_call.1}
  #allocation0 [shape = 'u32[]', space=smem, size = 0x4, offset = 0x4, fixed_abs, tag = 'smem constant byte address 0x4 - core index']
  #allocation1 [shape = 'u32[72,128]{1,0:T(1,128)}', space=vmem, size = 0x9000, scoped, tag = 'internal scratch']
  %s0 = inlined_call_operand.hbm [shape: f32[2,32], index: 0, kind: input, shape index: {}]
  %s1 = inlined_call_operand.hbm [shape: f32[1,8,32], index: 1, kind: output, shape index: {}]
  %s2 = sld [smem:[#allocation0]]
  $region18: #{tpu_custom_call.1} parent=0
    _
  %s4 = ssub.s32 1, %s2
  %s5 = scalar_select 0, %s4, %s2
  $region1: #{tpu_custom_call.1} parent=0
    #allocation2 [shape = 'u8[1024]{0}', space=vmem, size = 0x400, scoped, tag = 'input window, operand 0, single buffered']
    #allocation3 [shape = 's32[1]{0}', space=sflag, size = 0x4, scoped, tag = 'scoped memory for tpu_custom_call.1']
    #allocation4 [shape = 's32[1]{0}', space=sflag, size = 0x4, scoped, tag = 'scoped memory for tpu_custom_call.1']
    #allocation5 [shape = 'u8[4096]{0}', space=vmem, size = 0x1000, scoped, tag = 'output window, operand 0, single buffered']
    %6 = vsyncpa [#allocation3], 0
    %7 = vsyncpa [#allocation4], 0
    // Predicated region
    $region2: #{tpu_custom_call.1} parent=1 // pred_check
      _
    $region3: #{tpu_custom_call.1} parent=1 // pred_check_branch
      %9 = sbr.rel (0) target = $region5
    $region4: #{tpu_custom_call.1} parent=1 // pred_region
      %11 = vsyncadd [#allocation3], 0
      %s13 = sshll.u32 %s0, 4
      %s14 = int_to_ptr.hbm [resolvable:$true] %s13
      %s15 = sshll.u32 [#allocation2], 4
      %s16 = int_to_ptr.vmem [resolvable:$true] %s15
      %18 = dma.hbm_to_vmem [thread:$0]  %s14, 32, %s16, [#allocation3]
    $region5: #{tpu_custom_call.1} parent=1 // pred_fallthru
      _
    // Predicated region
    $region6: #{tpu_custom_call.1} parent=1 // pred_check
      _
    $region7: #{tpu_custom_call.1} parent=1 // pred_check_branch
      %20 = sbr.rel (0) target = $region9
    $region8: #{tpu_custom_call.1} parent=1 // pred_region
      %22 = dma.done [#allocation3], 32
    $region9: #{tpu_custom_call.1} parent=1 // pred_fallthru
      _
    %v23 = vlaneseq
    %v24 = vshrl.u32 %v23, 7
    %s25 = smul.u32 0, 8
    %v26 = vstv %s25
    %v27 = vadd.s32 %v24, %v26
    %v28 = vcvt.s32.f32 %v27
    %v29 = vld [vmem:[#allocation2] sm:$0x1]
    %v30 = vld [vmem:[#allocation2 + $0x1] sm:$0x1]
    %v31 = vperm.slane %v29, 0
    %v32 = vmul.f32 %v28, %v31
    %v33 = vperm.slane %v30, 0
    %v34 = vadd.f32 %v32, %v33
    %v35 = vand.u32 2147483647, %v34
    %vm36 = vcmp.le.f32.partialorder %v35, 0.7853982
    %vm37 = vcmp.lt.s32.totalorder %v34, 0
    %v38 = vand.u32 %v34, 2139095040
    %v39 = vshrl.u32 %v38, 23
    %v40 = vsub.s32 %v39, 127
    %v41 = vand.u32 2147483647, %v34
    %v42 = vand.u32 %v41, 8388607
    %v43 = vor.u32 %v42, 8388608
    %v44 = vsub.s32 0, %v43
    %v45 = vadd.s32 %v40, 1
    %vm46 = vcmp.gt.s32.totalorder %v45, 0
    %v47 = vsel %vm46, %v45, 0
    %v48 = vshrl.u32 %v47, 5
    %v49 = vand.u32 %v47, 31
    %v50 = vsub.s32 32, %v49
    %v51 = vshrl.u32 683565275, %v50
    %v52 = vshll.u32 683565275, %v49
    %v53 = vshrl.u32 2475754826, %v50
    %v54 = vor.u32 %v52, %v53
    %v55 = vshll.u32 2475754826, %v49
    %v56 = vshrl.u32 2131351028, %v50
    %v57 = vor.u32 %v55, %v56
    %v58 = vshll.u32 2131351028, %v49
    %v59 = vshrl.u32 2102212464, %v50
    %v60 = vor.u32 %v58, %v59
    %v61 = vshll.u32 2102212464, %v49
    %v62 = vshrl.u32 920167782, %v50
    %v63 = vor.u32 %v61, %v62
    %v64 = vshll.u32 920167782, %v49
    %v65 = vshrl.u32 1326507024, %v50
    %v66 = vor.u32 %v64, %v65
    %vm67 = vcmp.lt.s32.totalorder %v48, 1
    %vm68 = vcmp.lt.s32.totalorder %v48, 2
    %vm69 = vcmp.lt.s32.totalorder %v48, 3
    %vm70 = vcmp.lt.s32.totalorder %v48, 4
    %v71 = vsel %vm67, %v51, %v54
    %v72 = vsel %vm70, %v60, 2102212464
    %v73 = vsel %vm69, %v57, %v72
    %v74 = vsel %vm68, %v71, %v73
    %v75 = vsel %vm67, %v54, %v57
    %v76 = vsel %vm70, %v63, 920167782
    %v77 = vsel %vm69, %v60, %v76
    %v78 = vsel %vm68, %v75, %v77
    %v79 = vsel %vm67, %v57, %v60
    %v80 = vsel %vm70, %v66, 1326507024
    %v81 = vsel %vm69, %v63, %v80
    %v82 = vsel %vm68, %v79, %v81
    %v83 = vshll.u32 %v43, 8
    %v84 = vand.u32 %v83, 65535
    %v85 = vshrl.u32 %v83, 16
    %v86 = vand.u32 %v82, 65535
    %v87 = vshrl.u32 %v82, 16
    %v88 = vmul.u32 %v84, %v86
    %v89 = vmul.u32 %v84, %v87
    %v90 = vmul.u32 %v85, %v86
    %v91 = vmul.u32 %v85, %v87
    %v92 = vshll.u32 %v89, 16
    %v93 = vshrl.u32 %v89, 16
    %v94 = vshll.u32 %v90, 16
    %v95 = vshrl.u32 %v90, 16
    %vm96 = vc.u32 %v88, %v92
    %v97 = vsel %vm96, 1, 0
    %v98 = vadd.s32 %v88, %v92
    %v99 = vadd.s32 %v91, %v97
    %vm100 = vc.u32 %v98, %v94
    %v101 = vsel %vm100, 1, 0
    %v102 = vadd.s32 %v98, %v94
    %v103 = vadd.s32 %v99, %v101
    %v104 = vadd.s32 %v103, %v93
    %v105 = vadd.s32 %v104, %v95
    %v106 = vand.u32 %v83, 65535
    %v107 = vshrl.u32 %v83, 16
    %v108 = vand.u32 %v78, 65535
    %v109 = vshrl.u32 %v78, 16
    %v110 = vmul.u32 %v106, %v108
    %v111 = vmul.u32 %v106, %v109
    %v112 = vmul.u32 %v107, %v108
    %v113 = vmul.u32 %v107, %v109
    %v114 = vshll.u32 %v111, 16
    %v115 = vshrl.u32 %v111, 16
    %v116 = vshll.u32 %v112, 16
    %v117 = vshrl.u32 %v112, 16
    %vm118 = vc.u32 %v110, %v114
    %v119 = vsel %vm118, 1, 0
    %v120 = vadd.s32 %v110, %v114
    %v121 = vadd.s32 %v113, %v119
    %vm122 = vc.u32 %v120, %v116
    %v123 = vsel %vm122, 1, 0
    %v124 = vadd.s32 %v120, %v116
    %v125 = vadd.s32 %v121, %v123
    %v126 = vadd.s32 %v125, %v115
    %v127 = vadd.s32 %v126, %v117
    %v128 = vmul.u32 %v83, %v74
    %v129 = vadd.s32 %v105, %v124
    %vm130 = vc.u32 %v105, %v124
    %v131 = vadd.s32 %v127, 1
    %v132 = vsel %vm130, %v131, %v127
    %v133 = vadd.s32 %v128, %v132
    %v134 = vadd.s32 %v133, 536870912
    %v135 = vshrl.u32 %v134, 30
    %v136 = vshll.u32 %v135, 30
    %v137 = vsub.s32 %v133, %v136
    %vm138 = vcmp.lt.s32.totalorder %v137, 0
    %v139 = vsub.s32 0, %v137
    %v140 = vsel %vm138, %v139, %v137
    %v141 = vclz %v140
    %v142 = vsub.s32 %v141, 2
    %vm143 = vcmp.gt.s32.totalorder 0, %v142
    %v144 = vsel %vm143, 0, %v142
    %v145 = vsub.s32 32, %v144
    %v146 = vshll.u32 %v137, %v144
    %v147 = vshrl.u32 %v129, %v145
    %v148 = vor.u32 %v146, %v147
    %v149 = vsub.s32 4294967266, %v144
    %v150 = vadd.s32 %v149, 127
    %v151 = vshll.u32 %v150, 23
    %v152 = vor.u32 4788187, %v151
    %v153 = vand.u32 2147483647, %v152
    %v155 = vcvt.s32.f32 %v148
    %v156 = vmul.f32 %v155, %v153
    %v157 = vxor.u32 %v156, 2147483648
    %v158 = vsel %vm37, %v157, %v156
    %v159 = vsub.s32 4, %v135
    %v160 = vsel %vm37, %v159, %v135
    %v161 = vsel %vm36, %v34, %v158
    %v162 = vsel %vm36, 0, %v160
    %v163 = vmul.f32 %v161, %v161
    %v164 = vmul.f32 %v163, -0.001358992
    %v165 = vadd.f32 %v164, 0.041655596
    %v166 = vmul.f32 %v163, %v165
    %v167 = vadd.f32 %v166, -0.4999988
    %v168 = vmul.f32 %v163, %v167
    %v169 = vadd.f32 1.0, %v168
    %v170 = vmul.f32 %v161, %v161
    %v171 = vmul.f32 %v170, -0.00019511016
    %v172 = vadd.f32 %v171, 0.008332121
    %v173 = vmul.f32 %v170, %v172
    %v174 = vadd.f32 %v173, -0.16666654
    %v175 = vmul.f32 %v170, %v174
    %v176 = vadd.f32 %v175, 1.0
    %v177 = vmul.f32 %v176, %v161
    %vm178 = vweird.f32 %v34
    %v179 = vadd.s32 %v162, 3
    %v180 = vand.u32 %v179, 3
    %vm181 = vcmp.lt.s32.totalorder %v180, 2
    %vm182 = vcmp.eq.s32.totalorder %v180, 0
    %v183 = vxor.u32 %v177, 2147483648
    %v184 = vsel %vm182, %v169, %v183
    %vm185 = vcmp.eq.s32.totalorder %v180, 2
    %v186 = vxor.u32 %v169, 2147483648
    %v187 = vsel %vm185, %v186, %v177
    %v188 = vsel %vm181, %v184, %v187
    %v189 = vsel %vm178, nan, %v188
    %vm190 = vcmask 261120
    %191 = vst.msk [vmem:[#allocation5] sm:$0xff] %vm190, %v189
    // Predicated region
    $region10: #{tpu_custom_call.1} parent=1 // pred_check
      _
    $region11: #{tpu_custom_call.1} parent=1 // pred_check_branch
      %193 = sbr.rel (0) target = $region13
    $region12: #{tpu_custom_call.1} parent=1 // pred_region
      %195 = vsyncadd [#allocation4], 0
      %s197 = sshll.u32 [#allocation5], 4
      %s198 = int_to_ptr.vmem [resolvable:$true] %s197
      %s199 = sshll.u32 %s1, 4
      %s200 = int_to_ptr.hbm [resolvable:$true] %s199
      %202 = dma.vmem_to_hbm [thread:$0]  %s198, 128, %s200, [#allocation4]
    $region13: #{tpu_custom_call.1} parent=1 // pred_fallthru
      _
    // Predicated region
    $region14: #{tpu_custom_call.1} parent=1 // pred_check
      _
    $region15: #{tpu_custom_call.1} parent=1 // pred_check_branch
      %204 = sbr.rel (0) target = $region17
    $region16: #{tpu_custom_call.1} parent=1 // pred_region
      %206 = dma.done [#allocation4], 128
    $region17: #{tpu_custom_call.1} parent=1 // pred_fallthru
      _
    %207 = vsyncpa [#allocation3], 1
    %208 = vsyncpa [#allocation4], 1

</llo_original>
